<compile_context>
chip_gen: v5e
topology: v5e:2x2
jax: 0.10.0
libtpu: 0.0.40
codegen_flags: <defaults>
</compile_context>

<pallas_src>
import functools

import jax
import jax.numpy as jnp
from jax import lax
from jax.experimental import pallas as pl
from jax.experimental.pallas import tpu as pltpu


_LANES = 128        # lane-dense last dim
_SUBLANES = 8       # f32 sublane count -> (8, 128) vreg accumulator
_PAD_LOGIT = 1.0e4  # with target=1 gives an exactly-zero focal contribution


def _max_block_rows_for_device():
    """~1 MiB f32 x-blocks on v5-class parts (16 MiB scoped-VMEM default),
    ~4 MiB on v6e/v7x (32 MiB scoped default, plenty of headroom)."""
    try:
        kind = jax.devices()[0].device_kind.lower()
    except Exception:
        kind = ""
    if "v5" in kind:
        return 2048
    return 8192


def _focal_kernel(x_ref, t_ref, out_ref, *, gamma, hard_targets, block_rows,
                  valid_rows, needs_mask):
    """One (block_rows, 128) tile of elementwise focal loss (without alpha),
    reduced to an (8, 128) vreg and accumulated into the per-batch output
    block across the reduction grid axis."""
    k = pl.program_id(1)

    @pl.when(k == 0)
    def _():
        out_ref[...] = jnp.zeros_like(out_ref)

    x = x_ref[...].astype(jnp.float32)
    t = t_ref[...].astype(jnp.float32)

    if hard_targets:
        # Hard {0,1} targets: z = x*(1-2t), bce = softplus(z), 1-pt = sigmoid(z).
        # 2 heavy EUP ops (exp, log1p) + 1 cheap approx vrcp.
        z = x - 2.0 * (x * t)
        e = jnp.exp(-jnp.abs(z))
        bce = jnp.maximum(z, 0.0) + jnp.log1p(e)
        one_minus_pt = (jnp.where(z >= 0.0, 1.0, e)
                        * pl.reciprocal(1.0 + e, approx=True))
    else:
        # Exact formulation for (possibly soft) float targets:
        #   bce = max(x,0) - x*t + log1p(exp(-|x|));  pt = exp(-bce)
        bce = jnp.maximum(x, 0.0) - x * t + jnp.log1p(jnp.exp(-jnp.abs(x)))
        one_minus_pt = 1.0 - jnp.exp(-bce)

    if float(gamma) == int(gamma):
        # Integer power lowers to VPU multiplies; keeps the EUP slot free.
        mod = lax.integer_pow(one_minus_pt, int(gamma))
    else:
        mod = one_minus_pt ** gamma

    contrib = bce * mod                      # alpha is applied in the wrapper

    if needs_mask:
        # Only emitted when rows % block_rows != 0: zero out the garbage rows
        # of the (out-of-bounds) last block.
        row0 = k * block_rows
        rid = lax.broadcasted_iota(jnp.int32, (block_rows, _LANES), 0)
        contrib = jnp.where(rid + row0 < valid_rows, contrib, 0.0)

    if block_rows % _SUBLANES == 0:
        # Collapse to one vreg with pure elementwise vreg adds (no XLU).
        out_ref[...] += contrib.reshape(block_rows // _SUBLANES,
                                        _SUBLANES, _LANES).sum(axis=0)
    else:
        # Tiny single-step case (block_rows == rows < 8-aligned).
        out_ref[0:1, :] += jnp.sum(contrib, axis=0, keepdims=True)


def _launch(x4, t3, *, fg_channel, gamma, hard, max_block_rows):
    """x4: (N, C, rows, 128) logits; t3: (N, rows, 128) targets.
    Returns per-batch (N, 8, 128) partial sums of bce * (1-pt)**gamma."""
    n, c, rows, lanes = x4.shape
    assert lanes == _LANES and t3.shape == (n, rows, _LANES)

    block_rows = rows if rows <= max_block_rows else max_block_rows
    steps = pl.cdiv(rows, block_rows)
    needs_mask = (rows % block_rows) != 0

    kernel = functools.partial(
        _focal_kernel, gamma=gamma, hard_targets=hard,
        block_rows=block_rows, valid_rows=rows, needs_mask=needs_mask)

    elems = n * rows * _LANES
    cost = pl.CostEstimate(
        flops=12 * elems,
        transcendentals=(2 if hard else 3) * elems,
        bytes_accessed=elems * (x4.dtype.itemsize + t3.dtype.itemsize)
                       + n * _SUBLANES * _LANES * 4)

    return pl.pallas_call(
        kernel,
        out_shape=jax.ShapeDtypeStruct((n, _SUBLANES, _LANES), jnp.float32),
        grid_spec=pltpu.PrefetchScalarGridSpec(
            num_scalar_prefetch=0,
            grid=(n, steps),
            in_specs=[
                # Foreground channel selected in the index_map -> only the
                # channel-1 plane is DMA'd from HBM.
                pl.BlockSpec((pl.Squeezed(), pl.Squeezed(), block_rows, _LANES),
                             lambda b, k: (b, fg_channel, k, 0)),
                pl.BlockSpec((pl.Squeezed(), block_rows, _LANES),
                             lambda b, k: (b, k, 0)),
            ],
            out_specs=pl.BlockSpec((pl.Squeezed(), _SUBLANES, _LANES),
                                   lambda b, k: (b, 0, 0)),
        ),
        compiler_params=pltpu.CompilerParams(
            # Batch axis shards across v7x's two TensorCores; the row-block
            # axis is the accumulation axis.
            dimension_semantics=("parallel", "arbitrary"),
            vmem_limit_bytes=32 * 1024 * 1024),
        cost_estimate=cost,
    )(x4, t3)


def focal_loss(inputs, targets, alpha=0.25, gamma=2, reduction="mean"):
    """Pallas TPU implementation of FocalLoss.forward.

    inputs:  (N, C>=2, H, W) logits; only the foreground channel (1) is used.
    targets: (N, 1, H, W) masks (bool/int => hard-target fast path, float =>
             exact soft-target path).
    """
    n, c, h, w = inputs.shape
    assert c >= 2, "expects >=2-channel logits (foreground = channel 1)"
    assert targets.size == n * h * w, "targets must be (N, 1, H, W)"

    t = targets.reshape(n, h * w)
    if t.dtype == jnp.bool_:
        t = t.astype(jnp.int8)               # keep narrow; f32 cast in-kernel
    hard = bool(jnp.issubdtype(t.dtype, jnp.integer))

    hw = h * w
    total = n * hw
    max_block_rows = _max_block_rows_for_device()

    if hw % _LANES == 0:
        # Fast path: free reshapes, foreground channel streamed straight from
        # HBM by the BlockSpec -> the plane is read exactly once.
        rows = hw // _LANES
        x4 = inputs.reshape(n, c, rows, _LANES)
        t3 = t.reshape(n, rows, _LANES)
        partial = _launch(x4, t3, fg_channel=1, gamma=gamma, hard=hard,
                          max_block_rows=max_block_rows)
    else:
        # Fallback (H*W not a multiple of 128): one extra HBM copy to a padded
        # lane-dense slab; pad (logit=+1e4, target=1) contributes exactly 0.
        # TODO(synk): a BoundedSlice/Element-based gather could avoid this copy.
        x = inputs[:, 1, :, :].reshape(-1)
        tf = t.reshape(-1)
        rows = pl.cdiv(total, _LANES)
        pad = rows * _LANES - total
        if pad:
            x = jnp.concatenate([x, jnp.full((pad,), _PAD_LOGIT, dtype=x.dtype)])
            tf = jnp.concatenate([tf, jnp.ones((pad,), dtype=tf.dtype)])
        x4 = x.reshape(1, 1, rows, _LANES)
        t3 = tf.reshape(1, rows, _LANES)
        partial = _launch(x4, t3, fg_channel=0, gamma=gamma, hard=hard,
                          max_block_rows=max_block_rows)

    # alpha hoisted out of the per-element kernel math; tiny XLA collapse.
    total_loss = jnp.float32(alpha) * jnp.sum(partial)
    # Mirrors the PyTorch module: 'mean' -> mean, anything else -> sum.
    if reduction == "mean":
        return total_loss / jnp.float32(total)
    return total_loss


if __name__ == "__main__":
    key = jax.random.PRNGKey(0)
    k1, k2 = jax.random.split(key)

    N, C, H, W = 2, 2, 16, 16
    inputs = jax.random.normal(k1, (N, C, H, W), dtype=jnp.float32)
    targets = (jax.random.uniform(k2, (N, 1, H, W)) > 0.5).astype(jnp.float32)

    # Pure-JAX reference of the same math.
    x = inputs[:, 1, :, :]
    t = targets[:, 0, :, :]
    bce = jnp.maximum(x, 0.0) - x * t + jnp.log1p(jnp.exp(-jnp.abs(x)))
    pt = jnp.exp(-bce)
    focal = 0.25 * (1.0 - pt) ** 2 * bce

    # Soft-target (float mask) path, 'mean' reduction: exact math.
    loss = focal_loss(inputs, targets, alpha=0.25, gamma=2, reduction="mean")
    loss = jax.block_until_ready(loss)
    ref = jnp.mean(focal)
    assert jnp.allclose(loss, ref, rtol=1e-5, atol=1e-6), (loss, ref)

    # Hard-target (int8 mask) fast path, 'sum' reduction: approx-vrcp tolerance.
    loss_sum = focal_loss(inputs, targets.astype(jnp.int8), alpha=0.25,
                          gamma=2, reduction="sum")
    loss_sum = jax.block_until_ready(loss_sum)
    ref_sum = jnp.sum(focal)
    assert jnp.allclose(loss_sum, ref_sum, rtol=1e-2, atol=1e-4), (loss_sum, ref_sum)

    print("KERNEL_OK")
</pallas_src>

<mosaic_0001>
module attributes {stable_mosaic.version = 11 : i64} {
  func.func @_focal_kernel(%arg0: i32, %arg1: i32, %arg2: memref<1x1x2x128xf32, #tpu.memory_space<vmem>>, %arg3: memref<1x2x128xf32, #tpu.memory_space<vmem>>, %arg4: memref<1x8x128xf32, #tpu.memory_space<vmem>>) attributes {dimension_semantics = [#tpu.dimension_semantics<parallel>, #tpu.dimension_semantics<arbitrary>], iteration_bounds = array<i64: 2, 1>, scalar_prefetch = 0 : i64, scratch_operands = 0 : i64, tpu.core_type = #tpu.core_type<tc>, window_params = [{transform_indices = @transform_0, window_bounds = array<i64: 1, 1, 2, 128>}, {transform_indices = @transform_1, window_bounds = array<i64: 1, 2, 128>}, {transform_indices = @transform_2, window_bounds = array<i64: 1, 8, 128>}]} {
    %c0_i32 = arith.constant 0 : i32
    %0 = arith.cmpi eq, %arg1, %c0_i32 : i32
    %1 = arith.extui %0 : i1 to i32
    %c0_i32_0 = arith.constant 0 : i32
    %2 = arith.cmpi ne, %1, %c0_i32_0 : i32
    scf.if %2 {
      %cst_17 = arith.constant 0.000000e+00 : f32
      %32 = vector.broadcast %cst_17 : f32 to vector<8x128xf32>
      %c0_18 = arith.constant 0 : index
      %c0_19 = arith.constant 0 : index
      %c0_20 = arith.constant 0 : index
      %33 = vector.load %arg4[%c0_18, %c0_19, %c0_20] : memref<1x8x128xf32, #tpu.memory_space<vmem>>, vector<1x8x128xf32>
      %34 = vector.shape_cast %33 : vector<1x8x128xf32> to vector<8x128xf32>
      %35 = vector.shape_cast %32 : vector<8x128xf32> to vector<1x8x128xf32>
      tpu.vector_store %arg4[%c0_18, %c0_19, %c0_20], %35 {strides = array<i32>} : memref<1x8x128xf32, #tpu.memory_space<vmem>>, vector<1x8x128xf32>,
    } else {
    }
    %c0 = arith.constant 0 : index
    %c0_1 = arith.constant 0 : index
    %c0_2 = arith.constant 0 : index
    %c0_3 = arith.constant 0 : index
    %3 = vector.load %arg2[%c0, %c0_1, %c0_2, %c0_3] : memref<1x1x2x128xf32, #tpu.memory_space<vmem>>, vector<1x1x2x128xf32>
    %4 = vector.shape_cast %3 : vector<1x1x2x128xf32> to vector<2x128xf32>
    %c0_4 = arith.constant 0 : index
    %c0_5 = arith.constant 0 : index
    %c0_6 = arith.constant 0 : index
    %5 = vector.load %arg3[%c0_4, %c0_5, %c0_6] : memref<1x2x128xf32, #tpu.memory_space<vmem>>, vector<1x2x128xf32>
    %6 = vector.shape_cast %5 : vector<1x2x128xf32> to vector<2x128xf32>
    %cst = arith.constant 0.000000e+00 : f32
    %7 = vector.broadcast %cst : f32 to vector<2x128xf32>
    %8 = arith.maximumf %4, %7 : vector<2x128xf32>
    %9 = arith.mulf %4, %6 : vector<2x128xf32>
    %10 = arith.subf %8, %9 : vector<2x128xf32>
    %11 = math.absf %4 : vector<2x128xf32>
    %cst_7 = arith.constant 0.000000e+00 : f32
    %12 = vector.broadcast %cst_7 : f32 to vector<2x128xf32>
    %13 = arith.subf %12, %11 : vector<2x128xf32>
    %14 = math.exp %13 : vector<2x128xf32>
    %15 = math.log1p %14 : vector<2x128xf32>
    %16 = arith.addf %10, %15 : vector<2x128xf32>
    %cst_8 = arith.constant 0.000000e+00 : f32
    %17 = vector.broadcast %cst_8 : f32 to vector<2x128xf32>
    %18 = arith.subf %17, %16 : vector<2x128xf32>
    %19 = math.exp %18 : vector<2x128xf32>
    %cst_9 = arith.constant 1.000000e+00 : f32
    %20 = vector.broadcast %cst_9 : f32 to vector<2x128xf32>
    %21 = arith.subf %20, %19 : vector<2x128xf32>
    %22 = arith.mulf %21, %21 : vector<2x128xf32>
    %23 = arith.mulf %16, %22 : vector<2x128xf32>
    %c0_10 = arith.constant 0 : index
    %c0_11 = arith.constant 0 : index
    %c0_12 = arith.constant 0 : index
    %24 = vector.load %arg4[%c0_10, %c0_11, %c0_12] : memref<1x8x128xf32, #tpu.memory_space<vmem>>, vector<1x1x128xf32>
    %25 = vector.shape_cast %24 : vector<1x1x128xf32> to vector<1x128xf32>
    %cst_13 = arith.constant dense<0.000000e+00> : vector<128xf32>
    %26 = vector.multi_reduction <add>, %23, %cst_13 [0] : vector<2x128xf32> to vector<128xf32>
    %27 = vector.shape_cast %26 : vector<128xf32> to vector<1x128xf32>
    %28 = arith.addf %25, %27 : vector<1x128xf32>
    %c0_14 = arith.constant 0 : index
    %c0_15 = arith.constant 0 : index
    %c0_16 = arith.constant 0 : index
    %29 = vector.load %arg4[%c0_14, %c0_15, %c0_16] : memref<1x8x128xf32, #tpu.memory_space<vmem>>, vector<1x1x128xf32>
    %30 = vector.shape_cast %29 : vector<1x1x128xf32> to vector<1x128xf32>
    %31 = vector.shape_cast %28 : vector<1x128xf32> to vector<1x1x128xf32>
    tpu.vector_store %arg4[%c0_14, %c0_15, %c0_16], %31 {strides = array<i32>} : memref<1x8x128xf32, #tpu.memory_space<vmem>>, vector<1x1x128xf32>,
    return
  }
  func.func @transform_0(%arg0: i32, %arg1: i32) -> (i32, i32, i32, i32) {
    %c1_i32 = arith.constant 1 : i32
    %c0_i32 = arith.constant 0 : i32
    %c0_i32_0 = arith.constant 0 : i32
    return %arg0, %c1_i32, %arg1, %c0_i32 : i32, i32, i32, i32
  }
  func.func @transform_1(%arg0: i32, %arg1: i32) -> (i32, i32, i32) {
    %c0_i32 = arith.constant 0 : i32
    %c0_i32_0 = arith.constant 0 : i32
    return %arg0, %arg1, %c0_i32 : i32, i32, i32
  }
  func.func @transform_2(%arg0: i32, %arg1: i32) -> (i32, i32, i32) {
    %c0_i32 = arith.constant 0 : i32
    %c0_i32_0 = arith.constant 0 : i32
    %c0_i32_1 = arith.constant 0 : i32
    return %arg0, %c0_i32, %c0_i32_0 : i32, i32, i32
  }
}

</mosaic_0001>

<llo_original>
// kernel: tpu_custom_call.1
$region0: #{tpu_custom_call.1}
  #allocation0 [shape = 'u32[]', space=smem, size = 0x4, offset = 0x4, fixed_abs, tag = 'smem constant byte address 0x4 - core index']
  #allocation1 [shape = 'u32[72,128]{1,0:T(1,128)}', space=vmem, size = 0x9000, scoped, tag = 'internal scratch']
  %s0 = inlined_call_operand.hbm [shape: f32[2,2,2,128], index: 0, kind: input, shape index: {}]
  %s1 = inlined_call_operand.hbm [shape: f32[2,2,128], index: 1, kind: input, shape index: {}]
  %s2 = inlined_call_operand.hbm [shape: f32[2,8,128], index: 2, kind: output, shape index: {}]
  %s3 = sld [smem:[#allocation0]]
  $region53: #{tpu_custom_call.1} parent=0
    _
  %s5 = ssub.s32 1, %s3
  %s6 = scalar_select 0, %s5, %s3
  $region1: #{tpu_custom_call.1} parent=0
    #allocation2 [shape = 'u8[2048]{0}', space=vmem, size = 0x800, scoped, tag = 'input window, operand 0']
    #allocation3 [shape = 's32[2]{0}', space=sflag, size = 0x8, scoped, tag = 'scoped memory for tpu_custom_call.1']
    #allocation4 [shape = 's32[2]{0}', space=sflag, size = 0x8, scoped, tag = 'scoped memory for tpu_custom_call.1']
    #allocation5 [shape = 'u8[2048]{0}', space=vmem, size = 0x800, scoped, tag = 'input window, operand 1']
    #allocation6 [shape = 's32[2]{0}', space=sflag, size = 0x8, scoped, tag = 'scoped memory for tpu_custom_call.1']
    #allocation7 [shape = 'u8[8192]{0}', space=vmem, size = 0x2000, scoped, tag = 'output window, operand 0']
    %7 = vsyncpa [#allocation3], 0
    %s8 = scalar_lea.sflag [#allocation3], 1
    %9 = vsyncpa %s8, 0
    %10 = vsyncpa [#allocation6], 0
    %s11 = scalar_lea.sflag [#allocation6], 1
    %12 = vsyncpa %s11, 0
    %13 = vsyncpa [#allocation4], 0
    %s14 = scalar_lea.sflag [#allocation4], 1
    %15 = vsyncpa %s14, 0
    loop: start=0, step=1, limit=4
    $region2: #{tpu_custom_call.1} parent=1 // loop_pre_header
      _
    $region3: #{tpu_custom_call.1} parent=1 // loop_header
      %s17 = sphi 0, %s21
      %p18 = scmp.ge.s32.totalorder %s17, 4
      %s24 = sphi 0, %s36
      %s25 = sphi 0, %s32
      %s26 = sphi 0, %s24
      %s27 = sphi 0, %s25
      %s28 = sphi 0, %s26
      %s29 = sphi 0, %s27
      %s41 = sphi 0, %s43
      %s44 = sphi 0, %s41
      %s45 = sphi 0, %s44
      %s61 = sphi 0, %s45
      %s69 = sphi 0, %s71
      %s72 = sphi 0, %s69
      %s73 = sphi 0, %s72
      %s89 = sphi 0, %s73
      %s95 = sphi 0, %s97
      %s98 = sphi 0, %s95
      %s99 = sphi 0, %s98
      %s115 = sphi 0, %s99
    $region4: #{tpu_custom_call.1} parent=1 // loop_header_branch
      %20 = sbr.rel (%p18) target = $region8
    $region5: #{tpu_custom_call.1} parent=1 // loop_body
      %s22 = ssub.s32 %s17, 1
      %s23 = ssub.s32 %s17, 2
      %s30 = sadd.s32 1, %s25
      %p31 = scmp.ge.s32.totalorder %s30, 1
      %s32 = scalar_select %p31, 0, %s30
      %s33 = sadd.s32 1, %s24
      %s34 = scalar_select %p31, %s33, %s24
      %p35 = scmp.ge.s32.totalorder %s34, 2
      %s36 = scalar_select %p35, 0, %s34
      %s37 = ssub.s32 %s24, %s36
      %s38 = ssub.s32 %s25, %s32
      %s39 = sor.u32 %s37, %s38
      %p40 = scmp.eq.s32.totalorder %s39, 0
      %s42 = sadd.s32 %s41, 1
      %s43 = scalar_select %p40, %s41, %s42
      %p46 = pneg %p40
      %p47 = scmp.eq.s32.totalorder %s17, 1
      %p48 = por %p46, %p47
      %p49 = scmp.ne.s32.totalorder %s41, %s44
      %p50 = scmp.eq.s32.totalorder %s17, 0
      %p51 = por %p49, %p50
      %p52 = scmp.ne.s32.totalorder %s41, %s44
      %p53 = scmp.eq.s32.totalorder %s22, 1
      %p54 = por %p52, %p53
      %p55 = scmp.ne.s32.totalorder %s44, %s45
      %p56 = scmp.eq.s32.totalorder %s22, 0
      %p57 = por %p55, %p56
      %p58 = scmp.ne.s32.totalorder %s44, %s45
      %p59 = scmp.eq.s32.totalorder %s23, 1
      %p60 = por %p58, %p59
      %p62 = scmp.ne.s32.totalorder %s45, %s61
      %p63 = scmp.eq.s32.totalorder %s23, 0
      %p64 = por %p62, %p63
      %s65 = ssub.s32 %s24, %s36
      %s66 = ssub.s32 %s25, %s32
      %s67 = sor.u32 %s65, %s66
      %p68 = scmp.eq.s32.totalorder %s67, 0
      %s70 = sadd.s32 %s69, 1
      %s71 = scalar_select %p68, %s69, %s70
      %p74 = pneg %p68
      %p75 = scmp.eq.s32.totalorder %s17, 1
      %p76 = por %p74, %p75
      %p77 = scmp.ne.s32.totalorder %s69, %s72
      %p78 = scmp.eq.s32.totalorder %s17, 0
      %p79 = por %p77, %p78
      %p80 = scmp.ne.s32.totalorder %s69, %s72
      %p81 = scmp.eq.s32.totalorder %s22, 1
      %p82 = por %p80, %p81
      %p83 = scmp.ne.s32.totalorder %s72, %s73
      %p84 = scmp.eq.s32.totalorder %s22, 0
      %p85 = por %p83, %p84
      %p86 = scmp.ne.s32.totalorder %s72, %s73
      %p87 = scmp.eq.s32.totalorder %s23, 1
      %p88 = por %p86, %p87
      %p90 = scmp.ne.s32.totalorder %s73, %s89
      %p91 = scmp.eq.s32.totalorder %s23, 0
      %p92 = por %p90, %p91
      %s93 = ssub.s32 %s24, %s36
      %p94 = scmp.eq.s32.totalorder %s93, 0
      %s96 = sadd.s32 %s95, 1
      %s97 = scalar_select %p94, %s95, %s96
      %p100 = pneg %p94
      %p101 = scmp.eq.s32.totalorder %s17, 1
      %p102 = por %p100, %p101
      %p103 = scmp.ne.s32.totalorder %s95, %s98
      %p104 = scmp.eq.s32.totalorder %s17, 0
      %p105 = por %p103, %p104
      %p106 = scmp.ne.s32.totalorder %s95, %s98
      %p107 = scmp.eq.s32.totalorder %s22, 1
      %p108 = por %p106, %p107
      %p109 = scmp.ne.s32.totalorder %s98, %s99
      %p110 = scmp.eq.s32.totalorder %s22, 0
      %p111 = por %p109, %p110
      %p112 = scmp.ne.s32.totalorder %s98, %s99
      %p113 = scmp.eq.s32.totalorder %s23, 1
      %p114 = por %p112, %p113
      %p116 = scmp.ne.s32.totalorder %s99, %s115
      %p117 = scmp.eq.s32.totalorder %s23, 0
      %p118 = por %p116, %p117
      %p119 = scmp.le.s32.totalorder 1, %s17
      %p120 = scmp.lt.s32.totalorder %s17, 3
      %p121 = pnand %p119, %p120
      %p122 = pneg %p121
      // Predicated region
      $region9: #{tpu_custom_call.1} parent=5 // pred_check
        _
      $region10: #{tpu_custom_call.1} parent=5 // pred_check_branch
        %124 = sbr.rel (%p121) target = $region12
      $region11: #{tpu_custom_call.1} parent=5 // pred_region
        %s125 = ssub.s32 %s17, 1
      $region12: #{tpu_custom_call.1} parent=5 // pred_fallthru
        _
      %p126 = scmp.lt.s32.totalorder %s17, 2
      // Predicated region
      $region13: #{tpu_custom_call.1} parent=5 // pred_check
        %p127 = pneg %p126
      $region14: #{tpu_custom_call.1} parent=5 // pred_check_branch
        %129 = sbr.rel (%p127) target = $region16
      $region15: #{tpu_custom_call.1} parent=5 // pred_region
        // Predicated region
        $region17: #{tpu_custom_call.1} parent=15 // pred_check
          %p130 = pneg %p51
        $region18: #{tpu_custom_call.1} parent=15 // pred_check_branch
          %132 = sbr.rel (%p130) target = $region20
        $region19: #{tpu_custom_call.1} parent=15 // pred_region
          %s133 = sand.u32 %s41, 1
          %s134 = scalar_lea.sflag [#allocation3], %s133
          %s135 = sand.u32 %s41, 1
          %s136 = smul.addr %s135, 2
          %s137 = scalar_lea.vmem [#allocation2], %s136
          %139 = vsyncadd %s134, 0
          %s140 = sadd.s32 %s25, 1
          %s141 = smul.addr %s24, 2
          %s142 = sadd.s32 %s140, %s141
          %s143 = smul.addr %s142, 2
          %s144 = scalar_lea.hbm %s0, %s143
          %s146 = sshll.u32 %s144, 4
          %s147 = int_to_ptr.hbm [resolvable:$true] %s146
          %s148 = sshll.u32 %s137, 4
          %s149 = int_to_ptr.vmem [resolvable:$true] %s148
          %151 = dma.hbm_to_vmem [thread:$0]  %s147, 32, %s149, %s134
        $region20: #{tpu_custom_call.1} parent=15 // pred_fallthru
          _
        // Predicated region
        $region21: #{tpu_custom_call.1} parent=15 // pred_check
          %p152 = pneg %p79
        $region22: #{tpu_custom_call.1} parent=15 // pred_check_branch
          %154 = sbr.rel (%p152) target = $region24
        $region23: #{tpu_custom_call.1} parent=15 // pred_region
          %s155 = sand.u32 %s69, 1
          %s156 = scalar_lea.sflag [#allocation6], %s155
          %s157 = sand.u32 %s69, 1
          %s158 = smul.addr %s157, 2
          %s159 = scalar_lea.vmem [#allocation5], %s158
          %161 = vsyncadd %s156, 0
          %s162 = sadd.s32 %s25, %s24
          %s163 = smul.addr %s162, 2
          %s164 = scalar_lea.hbm %s1, %s163
          %s166 = sshll.u32 %s164, 4
          %s167 = int_to_ptr.hbm [resolvable:$true] %s166
          %s168 = sshll.u32 %s159, 4
          %s169 = int_to_ptr.vmem [resolvable:$true] %s168
          %171 = dma.hbm_to_vmem [thread:$0]  %s167, 32, %s169, %s156
        $region24: #{tpu_custom_call.1} parent=15 // pred_fallthru
          _
      $region16: #{tpu_custom_call.1} parent=5 // pred_fallthru
        _
      %p172 = scmp.le.s32.totalorder 1, %s17
      %p173 = scmp.lt.s32.totalorder %s17, 3
      %p174 = pnand %p172, %p173
      %p175 = pneg %p174
      // Predicated region
      $region25: #{tpu_custom_call.1} parent=5 // pred_check
        _
      $region26: #{tpu_custom_call.1} parent=5 // pred_check_branch
        %177 = sbr.rel (%p174) target = $region28
      $region27: #{tpu_custom_call.1} parent=5 // pred_region
        %s178 = ssub.s32 %s17, 1
        %s179 = sand.u32 %s44, 1
        %s180 = scalar_lea.sflag [#allocation3], %s179
        %s181 = sand.u32 %s44, 1
        %s182 = smul.addr %s181, 2
        %s183 = scalar_lea.vmem [#allocation2], %s182
        // Predicated region
        $region29: #{tpu_custom_call.1} parent=27 // pred_check
          %p184 = pneg %p57
        $region30: #{tpu_custom_call.1} parent=27 // pred_check_branch
          %186 = sbr.rel (%p184) target = $region32
        $region31: #{tpu_custom_call.1} parent=27 // pred_region
          %188 = dma.done %s180, 32
        $region32: #{tpu_custom_call.1} parent=27 // pred_fallthru
          _
        %s189 = sand.u32 %s72, 1
        %s190 = scalar_lea.sflag [#allocation6], %s189
        %s191 = sand.u32 %s72, 1
        %s192 = smul.addr %s191, 2
        %s193 = scalar_lea.vmem [#allocation5], %s192
        // Predicated region
        $region33: #{tpu_custom_call.1} parent=27 // pred_check
          %p194 = pneg %p85
        $region34: #{tpu_custom_call.1} parent=27 // pred_check_branch
          %196 = sbr.rel (%p194) target = $region36
        $region35: #{tpu_custom_call.1} parent=27 // pred_region
          %198 = dma.done %s190, 32
        $region36: #{tpu_custom_call.1} parent=27 // pred_fallthru
          _
        %s199 = sand.u32 %s44, 1
        %s200 = scalar_lea.sflag [#allocation3], %s199
        %s201 = sand.u32 %s44, 1
        %s202 = smul.addr %s201, 2
        %s203 = scalar_lea.vmem [#allocation2], %s202
        %p204 = pneg %p57
        %p205 = pneg %p54
        %s206 = sand.u32 %s72, 1
        %s207 = scalar_lea.sflag [#allocation6], %s206
        %s208 = sand.u32 %s72, 1
        %s209 = smul.addr %s208, 2
        %s210 = scalar_lea.vmem [#allocation5], %s209
        %p211 = pneg %p85
        %p212 = pneg %p82
        %p213 = pneg %p111
        %p214 = pneg %p108
        %s215 = sand.u32 %s98, 1
        %s216 = scalar_lea.sflag [#allocation4], %s215
        %s217 = sand.u32 %s98, 1
        %s218 = smul.addr %s217, 8
        %s219 = scalar_lea.vmem [#allocation7], %s218
        %p220 = scmp.eq.s32.totalorder %s27, 0
        // Predicated region
        $region37: #{tpu_custom_call.1} parent=27 // pred_check
          %p221 = pneg %p220
        $region38: #{tpu_custom_call.1} parent=27 // pred_check_branch
          %223 = sbr.rel (%p221) target = $region40
        $region39: #{tpu_custom_call.1} parent=27 // pred_region
          %224 = vst [vmem:[%s219] sm:$0xff] 0.0
        $region40: #{tpu_custom_call.1} parent=27 // pred_fallthru
          _
        %v225 = vld [vmem:[%s183] sm:$0x3]
        %v226 = vld [vmem:[%s193] sm:$0x3]
        %v227 = vmax.f32 %v225, 0.0
        %v228 = vmul.f32 %v225, %v226
        %v229 = vsub.f32 %v227, %v228
        %v230 = vand.u32 2147483647, %v225
        %v231 = vsub.f32 0.0, %v230
        %v232 = vmul.f32 %v231, 1.442695
        %v233 = vpow.pop %v232
        %v234 = vadd.f32 %v233, 1.0
        %v235 = vlog2.pop %v234
        %v236 = vmul.f32 %v235, 0.6931472
        %v237 = vmul.f32 -0.5, %v233
        %v238 = vadd.f32 %v237, 1.0
        %v239 = vmul.f32 %v238, %v233
        %v240 = vand.u32 2147483647, %v233
        %vm241 = vcmp.lt.f32.partialorder %v240, 0.0004427343
        %v242 = vsel %vm241, %v239, %v236
        %v243 = vadd.f32 %v229, %v242
        %v244 = vsub.f32 0.0, %v243
        %v245 = vmul.f32 %v244, 1.442695
        %v246 = vpow.pop %v245
        %v247 = vsub.f32 1.0, %v246
        %v248 = vmul.f32 %v247, %v247
        %v249 = vmul.f32 %v243, %v248
        %v250 = vld [vmem:[%s219] sm:$0x1]
        %vm251 = vcmask 1041408
        %v252 = vsel %vm251, %v249, 0.0
        %v253 = vrot.slane %v252, 4
        %v254 = vadd.f32 %v252, %v253
        %v255 = vrot.slane %v254, 2
        %v256 = vadd.f32 %v254, %v255
        %v257 = vrot.slane %v256, 1
        %v258 = vadd.f32 %v256, %v257
        %v259 = vadd.f32 %v250, %v258
        %260 = vst [vmem:[%s219] sm:$0x1] %v259
        %s261 = sand.u32 %s98, 1
        %s262 = scalar_lea.sflag [#allocation4], %s261
        %s263 = sand.u32 %s98, 1
        %s264 = smul.addr %s263, 8
        %s265 = scalar_lea.vmem [#allocation7], %s264
        // Predicated region
        $region41: #{tpu_custom_call.1} parent=27 // pred_check
          %p266 = pneg %p108
        $region42: #{tpu_custom_call.1} parent=27 // pred_check_branch
          %268 = sbr.rel (%p266) target = $region44
        $region43: #{tpu_custom_call.1} parent=27 // pred_region
          %270 = vsyncadd %s262, 0
          %s271 = smul.addr %s26, 8
          %s272 = scalar_lea.hbm %s2, %s271
          %s274 = sshll.u32 %s265, 4
          %s275 = int_to_ptr.vmem [resolvable:$true] %s274
          %s276 = sshll.u32 %s272, 4
          %s277 = int_to_ptr.hbm [resolvable:$true] %s276
          %279 = dma.vmem_to_hbm [thread:$0]  %s275, 128, %s277, %s262
        $region44: #{tpu_custom_call.1} parent=27 // pred_fallthru
          _
      $region28: #{tpu_custom_call.1} parent=5 // pred_fallthru
        _
      %p280 = scmp.le.s32.totalorder 2, %s17
      // Predicated region
      $region45: #{tpu_custom_call.1} parent=5 // pred_check
        %p281 = pneg %p280
      $region46: #{tpu_custom_call.1} parent=5 // pred_check_branch
        %283 = sbr.rel (%p281) target = $region48
      $region47: #{tpu_custom_call.1} parent=5 // pred_region
        %s284 = ssub.s32 %s17, 2
        // Predicated region
        $region49: #{tpu_custom_call.1} parent=47 // pred_check
          %p285 = pneg %p114
        $region50: #{tpu_custom_call.1} parent=47 // pred_check_branch
          %287 = sbr.rel (%p285) target = $region52
        $region51: #{tpu_custom_call.1} parent=47 // pred_region
          %s288 = sand.u32 %s99, 1
          %s289 = scalar_lea.sflag [#allocation4], %s288
          %s290 = sand.u32 %s99, 1
          %s291 = smul.addr %s290, 8
          %s292 = scalar_lea.vmem [#allocation7], %s291
          %294 = dma.done %s289, 128
        $region52: #{tpu_custom_call.1} parent=47 // pred_fallthru
          _
      $region48: #{tpu_custom_call.1} parent=5 // pred_fallthru
        _
    $region6: #{tpu_custom_call.1} parent=1 // loop_footer
      %s21 = sadd.s32 1, %s17
    $region7: #{tpu_custom_call.1} parent=1 // loop_footer_branch
      %16 = sbr.rel target = $region3
    $region8: #{tpu_custom_call.1} parent=1 // loop_exit
      _
    %295 = vsyncpa [#allocation3], 1
    %s296 = scalar_lea.sflag [#allocation3], 1
    %297 = vsyncpa %s296, 1
    %298 = vsyncpa [#allocation6], 1
    %s299 = scalar_lea.sflag [#allocation6], 1
    %300 = vsyncpa %s299, 1
    %301 = vsyncpa [#allocation4], 1
    %s302 = scalar_lea.sflag [#allocation4], 1
    %303 = vsyncpa %s302, 1

</llo_original>
